<compile_context>
chip_gen: v7x
topology: tpu7x:2x2x1
jax: 0.10.0
libtpu: 0.0.40
codegen_flags: <defaults>
</compile_context>

<pallas_src>
import jax
import jax.numpy as jnp
from jax.experimental import pallas as pl
from jax.experimental.pallas import tpu as pltpu


def _kernel_split_kernel(p_ref, o_ref):
    # Identity forward: emit the parameter values (in-place via aliasing).
    o_ref[...] = p_ref[...]


def kernel_split_forward(singular_shift: jax.Array) -> dict:
    """Pallas equivalent of KernelSplit.forward().

    singular_shift: (c_out,) float32 parameter.
    Returns {'singular': array of identical shape/dtype/values}.
    """
    assert singular_shift.ndim == 1
    c_out = singular_shift.shape[0]

    # Lane-dense 2D slab for the kernel; the reshape result is a fresh buffer
    # so aliasing/donating it is safe and leaves the parameter untouched.
    p2d = singular_shift.reshape(1, c_out)

    out2d = pl.pallas_call(
        _kernel_split_kernel,
        out_shape=jax.ShapeDtypeStruct((1, c_out), singular_shift.dtype),
        # Gridless call: whole-array blocks resident in VMEM, no pipeline/loop.
        in_specs=[pl.BlockSpec(memory_space=pltpu.MemorySpace.VMEM)],
        out_specs=pl.BlockSpec(memory_space=pltpu.MemorySpace.VMEM),
        # Output aliases the input buffer -> no extra HBM traffic.
        input_output_aliases={0: 0},
    )(p2d)

    # TODO(synk): forward() contains no further compute — it only returns the
    # parameter, so nothing else to lower into the kernel.
    return {"singular": out2d.reshape(c_out)}


class KernelSplit:
    """JAX/Pallas port of the PyTorch KernelSplit module ('svd_s' head)."""

    def __init__(self, conv_dimension):
        c_in, c_out = conv_dimension
        # nn.Parameter(torch.zeros(c_out)) — deterministic zeros.
        self.singular_shift = jnp.zeros((c_out,), dtype=jnp.float32)

    def __call__(self):
        return kernel_split_forward(self.singular_shift)


if __name__ == "__main__":
    # Small shapes consistent with the module: conv_dimension = (c_in, c_out).
    c_in, c_out = 4, 8
    module = KernelSplit((c_in, c_out))

    # (Parameter is zeros by construction; key kept for the deterministic-input
    # convention / potential perturbation experiments.)
    key = jax.random.PRNGKey(0)
    del key

    out = module()
    result = jax.block_until_ready(out["singular"])

    assert result.shape == (c_out,), result.shape
    assert result.dtype == jnp.float32, result.dtype
    assert bool(jnp.all(result == 0.0))

    print("KERNEL_OK")
</pallas_src>

<mosaic_0001>
module attributes {stable_mosaic.version = 11 : i64} {
  func.func @_kernel_split_kernel(%arg0: memref<1x8xf32, #tpu.memory_space<vmem>>, %arg1: memref<1x8xf32, #tpu.memory_space<vmem>>) attributes {dimension_semantics = [], scalar_prefetch = 0 : i64, scratch_operands = 0 : i64, tpu.core_type = #tpu.core_type<tc>} {
    %c0 = arith.constant 0 : index
    %c0_0 = arith.constant 0 : index
    %0 = vector.load %arg0[%c0, %c0_0] : memref<1x8xf32, #tpu.memory_space<vmem>>, vector<1x8xf32>
    %c0_1 = arith.constant 0 : index
    %c0_2 = arith.constant 0 : index
    %1 = vector.load %arg1[%c0_1, %c0_2] : memref<1x8xf32, #tpu.memory_space<vmem>>, vector<1x8xf32>
    tpu.vector_store %arg1[%c0_1, %c0_2], %0 {strides = array<i32>} : memref<1x8xf32, #tpu.memory_space<vmem>>, vector<1x8xf32>,
    return
  }
}

</mosaic_0001>

<llo_original>
// kernel: tpu_custom_call.1
$region0: #{tpu_custom_call.1}
  #allocation0 [shape = 'u32[]', space=smem, size = 0x4, offset = 0x4, fixed_abs, tag = 'smem constant byte address 0x4 - core index']
  #allocation1 [shape = 'u32[144,128]{1,0:T(1,128)}', space=vmem, size = 0x12000, scoped, tag = 'internal scratch']
  %s0 = inlined_call_operand.hbm [shape: f32[1,8], index: 0, kind: input, shape index: {}, may-alias: {0,1}]
  %s1 = inlined_call_operand.hbm [shape: f32[1,8], index: 1, kind: output, shape index: {}, may-alias: {0,1}]
  %s2 = sld [smem:[#allocation0]]
  $region18: #{tpu_custom_call.1} parent=0
    _
  %s4 = ssub.s32 1, %s2
  %s5 = scalar_select 0, %s4, %s2
  $region1: #{tpu_custom_call.1} parent=0
    #allocation2 [shape = 'u8[512]{0}', space=vmem, size = 0x400, scoped, tag = 'input window, operand 0, single buffered']
    #allocation3 [shape = 's32[1]{0}', space=sflag, size = 0x4, scoped, tag = 'scoped memory for tpu_custom_call.1']
    #allocation4 [shape = 's32[1]{0}', space=sflag, size = 0x4, scoped, tag = 'scoped memory for tpu_custom_call.1']
    #allocation5 [shape = 'u8[512]{0}', space=vmem, size = 0x400, scoped, tag = 'output window, operand 0, single buffered']
    %6 = vsyncpa [#allocation3], 0
    %7 = vsyncpa [#allocation4], 0
    // Predicated region
    $region2: #{tpu_custom_call.1} parent=1 // pred_check
      _
    $region3: #{tpu_custom_call.1} parent=1 // pred_check_branch
      %9 = sbr.rel (0) target = $region5
    $region4: #{tpu_custom_call.1} parent=1 // pred_region
      %s11 = ssub.s32 16, 16
      %12 = vsyncadd [#allocation3], %s11
      %s14 = sshll.u32 [#allocation2], 4
      %s15 = int_to_ptr.vmem [resolvable:$true] %s14
      %17 = dma.hbm_to_vmem [thread:$0]  %s0, 16, %s15, [#allocation3]
    $region5: #{tpu_custom_call.1} parent=1 // pred_fallthru
      _
    // Predicated region
    $region6: #{tpu_custom_call.1} parent=1 // pred_check
      _
    $region7: #{tpu_custom_call.1} parent=1 // pred_check_branch
      %19 = sbr.rel (0) target = $region9
    $region8: #{tpu_custom_call.1} parent=1 // pred_region
      %20 = dma.done [#allocation3], 16
    $region9: #{tpu_custom_call.1} parent=1 // pred_fallthru
      _
    %v21 = vld [vmem:[#allocation2] sm:$0x1]
    %vm22 = vcmask 57344
    %23 = vst.msk [vmem:[#allocation5] sm:$0x1] %vm22, %v21
    // Predicated region
    $region10: #{tpu_custom_call.1} parent=1 // pred_check
      _
    $region11: #{tpu_custom_call.1} parent=1 // pred_check_branch
      %25 = sbr.rel (0) target = $region13
    $region12: #{tpu_custom_call.1} parent=1 // pred_region
      %s27 = ssub.s32 16, 16
      %28 = vsyncadd [#allocation4], %s27
      %s30 = sshll.u32 [#allocation5], 4
      %s31 = int_to_ptr.vmem [resolvable:$true] %s30
      %33 = dma.vmem_to_hbm [thread:$0]  %s31, 16, %s1, [#allocation4]
    $region13: #{tpu_custom_call.1} parent=1 // pred_fallthru
      _
    // Predicated region
    $region14: #{tpu_custom_call.1} parent=1 // pred_check
      _
    $region15: #{tpu_custom_call.1} parent=1 // pred_check_branch
      %35 = sbr.rel (0) target = $region17
    $region16: #{tpu_custom_call.1} parent=1 // pred_region
      %36 = dma.done [#allocation4], 16
    $region17: #{tpu_custom_call.1} parent=1 // pred_fallthru
      _
    %37 = vsyncpa [#allocation3], 1
    %38 = vsyncpa [#allocation4], 1

</llo_original>
